<compile_context>
chip_gen: v7x
topology: tpu7x:2x2x1
jax: 0.10.0
libtpu: 0.0.40
codegen_flags: <defaults>
</compile_context>

<pallas_src>
import functools

import jax
import jax.numpy as jnp
from jax.experimental import pallas as pl
from jax.experimental.pallas import tpu as pltpu

LANE = 128              # TPU lane width: batch elements per row of the slab
DEFAULT_TILE_ROWS = 1024  # rows per grid step (1024*128 batch elems, 512 KB/operand)

# Flat SMEM layout of the 29 parameter scalars:
#   [ 0:12]  W1 (3,4) row-major   -> W1[f, j] at f*4 + j
#   [12:16]  b1 (4,)
#   [16:24]  W2 (4,2) row-major   -> W2[i, j] at 16 + i*2 + j
#   [24:26]  b2 (2,)
#   [26:28]  W3 (2,1)
#   [28]     b3


def _mlp_kernel(w_ref, d_ref, h_ref, c_ref, o_ref):
    """Fused 3->4->2->1 sigmoid MLP on a (tile_rows, 128) batch slab.

    w_ref: SMEM f32[29] (weights/biases), resident across all grid steps.
    d_ref/h_ref/c_ref/o_ref: VMEM (tile_rows, 128), batch on lanes+sublanes.
    """
    d = d_ref[...]
    h = h_ref[...]
    c = c_ref[...]

    # Layer 1: 3 -> 4  (pure VPU FMAs with SMEM scalars; EUP sigmoid)
    h1 = [
        jax.nn.sigmoid(d * w_ref[0 + j] + h * w_ref[4 + j] + c * w_ref[8 + j]
                       + w_ref[12 + j])
        for j in range(4)
    ]

    # Layer 2: 4 -> 2
    h2 = [
        jax.nn.sigmoid(h1[0] * w_ref[16 + j] + h1[1] * w_ref[18 + j]
                       + h1[2] * w_ref[20 + j] + h1[3] * w_ref[22 + j]
                       + w_ref[24 + j])
        for j in range(2)
    ]

    # Layer 3: 2 -> 1  (lane-dense output store: 1 useful float per lane)
    o_ref[...] = jax.nn.sigmoid(h2[0] * w_ref[26] + h2[1] * w_ref[27]
                                + w_ref[28])


@functools.partial(jax.jit, static_argnames=("max_tile_rows",))
def neural_regressor_forward(d, h, c, params, *, max_tile_rows=DEFAULT_TILE_ROWS):
    """Matches NeuralRegressor.forward(d, h, c) -> (N, 1) float32."""
    assert max_tile_rows > 0 and max_tile_rows % 8 == 0
    W1, b1, W2, b2, W3, b3 = params

    # 29 parameter scalars, packed once into a tiny SMEM-resident vector.
    w_flat = jnp.concatenate([
        W1.astype(jnp.float32).reshape(-1),
        b1.astype(jnp.float32).reshape(-1),
        W2.astype(jnp.float32).reshape(-1),
        b2.astype(jnp.float32).reshape(-1),
        W3.astype(jnp.float32).reshape(-1),
        b3.astype(jnp.float32).reshape(-1),
    ])                                                           # (29,)

    n = d.shape[0]

    # Pack the batch onto lanes: (rows, 128), rows a multiple of 8 and of the
    # tile size so the grid divides evenly.
    rows_needed = max(1, pl.cdiv(n, LANE))
    rows_needed = ((rows_needed + 7) // 8) * 8
    if rows_needed <= max_tile_rows:
        tile_rows = rows_needed
        rows = rows_needed
    else:
        tile_rows = max_tile_rows
        rows = pl.cdiv(rows_needed, tile_rows) * tile_rows
    n_pad = rows * LANE

    def _prep(v):
        v = v.astype(jnp.float32).reshape(-1)
        if n_pad != n:
            v = jnp.pad(v, (0, n_pad - n))
        return v.reshape(rows, LANE)

    d_p, h_p, c_p = _prep(d), _prep(h), _prep(c)

    data_spec = pl.BlockSpec((tile_rows, LANE), lambda i: (i, 0))
    out = pl.pallas_call(
        _mlp_kernel,
        out_shape=jax.ShapeDtypeStruct((rows, LANE), jnp.float32),
        grid=(rows // tile_rows,),
        in_specs=[
            pl.BlockSpec(memory_space=pltpu.MemorySpace.SMEM),   # weights (resident)
            data_spec, data_spec, data_spec,                     # d, h, c tiles
        ],
        out_specs=data_spec,
        compiler_params=pltpu.CompilerParams(
            dimension_semantics=("parallel",)),                  # v7x: 2 TCs
    )(w_flat, d_p, h_p, c_p)

    return out.reshape(-1)[:n].reshape(n, 1)                     # (N, 1)


def init_params(key, n_features=3):
    """Deterministic init matching the PyTorch __init__ shapes / ranges."""
    k1, k2, k3, k4, k5, k6 = jax.random.split(key, 6)
    W1 = jax.random.uniform(k1, (n_features, 4), jnp.float32, 50.0, 100.0)
    b1 = jax.random.uniform(k2, (1, 4), jnp.float32, 5.0, 10.0)
    W2 = jax.random.uniform(k3, (4, 2), jnp.float32, 50.0, 100.0)
    b2 = jax.random.uniform(k4, (1, 2), jnp.float32, 5.0, 10.0)
    W3 = jax.random.uniform(k5, (2, 1), jnp.float32, 50.0, 100.0)
    b3 = jax.random.uniform(k6, (1, 1), jnp.float32, 5.0, 20.0)
    return (W1, b1, W2, b2, W3, b3)


def _reference(d, h, c, params):
    W1, b1, W2, b2, W3, b3 = params
    x = jnp.stack([d, h, c], axis=1).astype(jnp.float32)
    x = jax.nn.sigmoid(x @ W1 + b1)
    x = jax.nn.sigmoid(x @ W2 + b2)
    x = jax.nn.sigmoid(x @ W3 + b3)
    return x


if __name__ == "__main__":
    key = jax.random.PRNGKey(0)
    kp, kd, kh, kc = jax.random.split(key, 4)

    params = init_params(kp)
    # Down-scaled copy so sigmoids don't saturate to 1.0 and the arithmetic
    # path is actually exercised by the allclose check.
    small_params = tuple(p / 100.0 for p in params)

    # (N, max_tile_rows): single-tile small case, non-multiple-of-128 case,
    # and a forced multi-tile case (tile_rows=8 -> grid of 3 steps).
    cases = ((8, DEFAULT_TILE_ROWS), (300, DEFAULT_TILE_ROWS), (3000, 8))
    for N, tile_rows in cases:
        d = jax.random.uniform(kd, (N,), jnp.float32, -1.0, 1.0)
        h = jax.random.uniform(kh, (N,), jnp.float32, -1.0, 1.0)
        c = jax.random.uniform(kc, (N,), jnp.float32, -1.0, 1.0)
        for p in (small_params, params):
            out = jax.block_until_ready(
                neural_regressor_forward(d, h, c, p, max_tile_rows=tile_rows))
            ref = _reference(d, h, c, p)
            assert out.shape == (N, 1), out.shape
            assert jnp.allclose(out, ref, atol=1e-5, rtol=1e-5), (out, ref)

    print("KERNEL_OK")
</pallas_src>

<mosaic_0001>
module attributes {stable_mosaic.version = 11 : i64} {
  func.func @_mlp_kernel(%arg0: i32, %arg1: memref<29xf32, #tpu.memory_space<smem>>, %arg2: memref<8x128xf32, #tpu.memory_space<vmem>>, %arg3: memref<8x128xf32, #tpu.memory_space<vmem>>, %arg4: memref<8x128xf32, #tpu.memory_space<vmem>>, %arg5: memref<8x128xf32, #tpu.memory_space<vmem>>) attributes {dimension_semantics = [#tpu.dimension_semantics<parallel>], iteration_bounds = array<i64: 1>, scalar_prefetch = 0 : i64, scratch_operands = 0 : i64, tpu.core_type = #tpu.core_type<tc>, window_params = [{transform_indices = @transform_0, window_bounds = array<i64: 29>}, {transform_indices = @transform_1, window_bounds = array<i64: 8, 128>}, {transform_indices = @transform_2, window_bounds = array<i64: 8, 128>}, {transform_indices = @transform_3, window_bounds = array<i64: 8, 128>}, {transform_indices = @transform_4, window_bounds = array<i64: 8, 128>}]} {
    %c0 = arith.constant 0 : index
    %c0_0 = arith.constant 0 : index
    %0 = vector.load %arg2[%c0, %c0_0] : memref<8x128xf32, #tpu.memory_space<vmem>>, vector<8x128xf32>
    %c0_1 = arith.constant 0 : index
    %c0_2 = arith.constant 0 : index
    %1 = vector.load %arg3[%c0_1, %c0_2] : memref<8x128xf32, #tpu.memory_space<vmem>>, vector<8x128xf32>
    %c0_3 = arith.constant 0 : index
    %c0_4 = arith.constant 0 : index
    %2 = vector.load %arg4[%c0_3, %c0_4] : memref<8x128xf32, #tpu.memory_space<vmem>>, vector<8x128xf32>
    %c0_5 = arith.constant 0 : index
    %3 = memref.load %arg1[%c0_5] : memref<29xf32, #tpu.memory_space<smem>>
    %4 = vector.broadcast %3 : f32 to vector<8x128xf32>
    %5 = arith.mulf %0, %4 : vector<8x128xf32>
    %c4 = arith.constant 4 : index
    %6 = memref.load %arg1[%c4] : memref<29xf32, #tpu.memory_space<smem>>
    %7 = vector.broadcast %6 : f32 to vector<8x128xf32>
    %8 = arith.mulf %1, %7 : vector<8x128xf32>
    %9 = arith.addf %5, %8 : vector<8x128xf32>
    %c8 = arith.constant 8 : index
    %10 = memref.load %arg1[%c8] : memref<29xf32, #tpu.memory_space<smem>>
    %11 = vector.broadcast %10 : f32 to vector<8x128xf32>
    %12 = arith.mulf %2, %11 : vector<8x128xf32>
    %13 = arith.addf %9, %12 : vector<8x128xf32>
    %c12 = arith.constant 12 : index
    %14 = memref.load %arg1[%c12] : memref<29xf32, #tpu.memory_space<smem>>
    %15 = vector.broadcast %14 : f32 to vector<8x128xf32>
    %16 = arith.addf %13, %15 : vector<8x128xf32>
    %17 = arith.negf %16 : vector<8x128xf32>
    %18 = math.exp %17 : vector<8x128xf32>
    %cst = arith.constant 1.000000e+00 : f32
    %19 = vector.broadcast %cst : f32 to vector<8x128xf32>
    %20 = arith.addf %19, %18 : vector<8x128xf32>
    %21 = arith.divf %19, %20 : vector<8x128xf32>
    %c1 = arith.constant 1 : index
    %22 = memref.load %arg1[%c1] : memref<29xf32, #tpu.memory_space<smem>>
    %23 = vector.broadcast %22 : f32 to vector<8x128xf32>
    %24 = arith.mulf %0, %23 : vector<8x128xf32>
    %c5 = arith.constant 5 : index
    %25 = memref.load %arg1[%c5] : memref<29xf32, #tpu.memory_space<smem>>
    %26 = vector.broadcast %25 : f32 to vector<8x128xf32>
    %27 = arith.mulf %1, %26 : vector<8x128xf32>
    %28 = arith.addf %24, %27 : vector<8x128xf32>
    %c9 = arith.constant 9 : index
    %29 = memref.load %arg1[%c9] : memref<29xf32, #tpu.memory_space<smem>>
    %30 = vector.broadcast %29 : f32 to vector<8x128xf32>
    %31 = arith.mulf %2, %30 : vector<8x128xf32>
    %32 = arith.addf %28, %31 : vector<8x128xf32>
    %c13 = arith.constant 13 : index
    %33 = memref.load %arg1[%c13] : memref<29xf32, #tpu.memory_space<smem>>
    %34 = vector.broadcast %33 : f32 to vector<8x128xf32>
    %35 = arith.addf %32, %34 : vector<8x128xf32>
    %36 = arith.negf %35 : vector<8x128xf32>
    %37 = math.exp %36 : vector<8x128xf32>
    %cst_6 = arith.constant 1.000000e+00 : f32
    %38 = vector.broadcast %cst_6 : f32 to vector<8x128xf32>
    %39 = arith.addf %38, %37 : vector<8x128xf32>
    %40 = arith.divf %38, %39 : vector<8x128xf32>
    %c2 = arith.constant 2 : index
    %41 = memref.load %arg1[%c2] : memref<29xf32, #tpu.memory_space<smem>>
    %42 = vector.broadcast %41 : f32 to vector<8x128xf32>
    %43 = arith.mulf %0, %42 : vector<8x128xf32>
    %c6 = arith.constant 6 : index
    %44 = memref.load %arg1[%c6] : memref<29xf32, #tpu.memory_space<smem>>
    %45 = vector.broadcast %44 : f32 to vector<8x128xf32>
    %46 = arith.mulf %1, %45 : vector<8x128xf32>
    %47 = arith.addf %43, %46 : vector<8x128xf32>
    %c10 = arith.constant 10 : index
    %48 = memref.load %arg1[%c10] : memref<29xf32, #tpu.memory_space<smem>>
    %49 = vector.broadcast %48 : f32 to vector<8x128xf32>
    %50 = arith.mulf %2, %49 : vector<8x128xf32>
    %51 = arith.addf %47, %50 : vector<8x128xf32>
    %c14 = arith.constant 14 : index
    %52 = memref.load %arg1[%c14] : memref<29xf32, #tpu.memory_space<smem>>
    %53 = vector.broadcast %52 : f32 to vector<8x128xf32>
    %54 = arith.addf %51, %53 : vector<8x128xf32>
    %55 = arith.negf %54 : vector<8x128xf32>
    %56 = math.exp %55 : vector<8x128xf32>
    %cst_7 = arith.constant 1.000000e+00 : f32
    %57 = vector.broadcast %cst_7 : f32 to vector<8x128xf32>
    %58 = arith.addf %57, %56 : vector<8x128xf32>
    %59 = arith.divf %57, %58 : vector<8x128xf32>
    %c3 = arith.constant 3 : index
    %60 = memref.load %arg1[%c3] : memref<29xf32, #tpu.memory_space<smem>>
    %61 = vector.broadcast %60 : f32 to vector<8x128xf32>
    %62 = arith.mulf %0, %61 : vector<8x128xf32>
    %c7 = arith.constant 7 : index
    %63 = memref.load %arg1[%c7] : memref<29xf32, #tpu.memory_space<smem>>
    %64 = vector.broadcast %63 : f32 to vector<8x128xf32>
    %65 = arith.mulf %1, %64 : vector<8x128xf32>
    %66 = arith.addf %62, %65 : vector<8x128xf32>
    %c11 = arith.constant 11 : index
    %67 = memref.load %arg1[%c11] : memref<29xf32, #tpu.memory_space<smem>>
    %68 = vector.broadcast %67 : f32 to vector<8x128xf32>
    %69 = arith.mulf %2, %68 : vector<8x128xf32>
    %70 = arith.addf %66, %69 : vector<8x128xf32>
    %c15 = arith.constant 15 : index
    %71 = memref.load %arg1[%c15] : memref<29xf32, #tpu.memory_space<smem>>
    %72 = vector.broadcast %71 : f32 to vector<8x128xf32>
    %73 = arith.addf %70, %72 : vector<8x128xf32>
    %74 = arith.negf %73 : vector<8x128xf32>
    %75 = math.exp %74 : vector<8x128xf32>
    %cst_8 = arith.constant 1.000000e+00 : f32
    %76 = vector.broadcast %cst_8 : f32 to vector<8x128xf32>
    %77 = arith.addf %76, %75 : vector<8x128xf32>
    %78 = arith.divf %76, %77 : vector<8x128xf32>
    %c16 = arith.constant 16 : index
    %79 = memref.load %arg1[%c16] : memref<29xf32, #tpu.memory_space<smem>>
    %80 = vector.broadcast %79 : f32 to vector<8x128xf32>
    %81 = arith.mulf %21, %80 : vector<8x128xf32>
    %c18 = arith.constant 18 : index
    %82 = memref.load %arg1[%c18] : memref<29xf32, #tpu.memory_space<smem>>
    %83 = vector.broadcast %82 : f32 to vector<8x128xf32>
    %84 = arith.mulf %40, %83 : vector<8x128xf32>
    %85 = arith.addf %81, %84 : vector<8x128xf32>
    %c20 = arith.constant 20 : index
    %86 = memref.load %arg1[%c20] : memref<29xf32, #tpu.memory_space<smem>>
    %87 = vector.broadcast %86 : f32 to vector<8x128xf32>
    %88 = arith.mulf %59, %87 : vector<8x128xf32>
    %89 = arith.addf %85, %88 : vector<8x128xf32>
    %c22 = arith.constant 22 : index
    %90 = memref.load %arg1[%c22] : memref<29xf32, #tpu.memory_space<smem>>
    %91 = vector.broadcast %90 : f32 to vector<8x128xf32>
    %92 = arith.mulf %78, %91 : vector<8x128xf32>
    %93 = arith.addf %89, %92 : vector<8x128xf32>
    %c24 = arith.constant 24 : index
    %94 = memref.load %arg1[%c24] : memref<29xf32, #tpu.memory_space<smem>>
    %95 = vector.broadcast %94 : f32 to vector<8x128xf32>
    %96 = arith.addf %93, %95 : vector<8x128xf32>
    %97 = arith.negf %96 : vector<8x128xf32>
    %98 = math.exp %97 : vector<8x128xf32>
    %cst_9 = arith.constant 1.000000e+00 : f32
    %99 = vector.broadcast %cst_9 : f32 to vector<8x128xf32>
    %100 = arith.addf %99, %98 : vector<8x128xf32>
    %101 = arith.divf %99, %100 : vector<8x128xf32>
    %c17 = arith.constant 17 : index
    %102 = memref.load %arg1[%c17] : memref<29xf32, #tpu.memory_space<smem>>
    %103 = vector.broadcast %102 : f32 to vector<8x128xf32>
    %104 = arith.mulf %21, %103 : vector<8x128xf32>
    %c19 = arith.constant 19 : index
    %105 = memref.load %arg1[%c19] : memref<29xf32, #tpu.memory_space<smem>>
    %106 = vector.broadcast %105 : f32 to vector<8x128xf32>
    %107 = arith.mulf %40, %106 : vector<8x128xf32>
    %108 = arith.addf %104, %107 : vector<8x128xf32>
    %c21 = arith.constant 21 : index
    %109 = memref.load %arg1[%c21] : memref<29xf32, #tpu.memory_space<smem>>
    %110 = vector.broadcast %109 : f32 to vector<8x128xf32>
    %111 = arith.mulf %59, %110 : vector<8x128xf32>
    %112 = arith.addf %108, %111 : vector<8x128xf32>
    %c23 = arith.constant 23 : index
    %113 = memref.load %arg1[%c23] : memref<29xf32, #tpu.memory_space<smem>>
    %114 = vector.broadcast %113 : f32 to vector<8x128xf32>
    %115 = arith.mulf %78, %114 : vector<8x128xf32>
    %116 = arith.addf %112, %115 : vector<8x128xf32>
    %c25 = arith.constant 25 : index
    %117 = memref.load %arg1[%c25] : memref<29xf32, #tpu.memory_space<smem>>
    %118 = vector.broadcast %117 : f32 to vector<8x128xf32>
    %119 = arith.addf %116, %118 : vector<8x128xf32>
    %120 = arith.negf %119 : vector<8x128xf32>
    %121 = math.exp %120 : vector<8x128xf32>
    %cst_10 = arith.constant 1.000000e+00 : f32
    %122 = vector.broadcast %cst_10 : f32 to vector<8x128xf32>
    %123 = arith.addf %122, %121 : vector<8x128xf32>
    %124 = arith.divf %122, %123 : vector<8x128xf32>
    %c26 = arith.constant 26 : index
    %125 = memref.load %arg1[%c26] : memref<29xf32, #tpu.memory_space<smem>>
    %126 = vector.broadcast %125 : f32 to vector<8x128xf32>
    %127 = arith.mulf %101, %126 : vector<8x128xf32>
    %c27 = arith.constant 27 : index
    %128 = memref.load %arg1[%c27] : memref<29xf32, #tpu.memory_space<smem>>
    %129 = vector.broadcast %128 : f32 to vector<8x128xf32>
    %130 = arith.mulf %124, %129 : vector<8x128xf32>
    %131 = arith.addf %127, %130 : vector<8x128xf32>
    %c28 = arith.constant 28 : index
    %132 = memref.load %arg1[%c28] : memref<29xf32, #tpu.memory_space<smem>>
    %133 = vector.broadcast %132 : f32 to vector<8x128xf32>
    %134 = arith.addf %131, %133 : vector<8x128xf32>
    %135 = arith.negf %134 : vector<8x128xf32>
    %136 = math.exp %135 : vector<8x128xf32>
    %cst_11 = arith.constant 1.000000e+00 : f32
    %137 = vector.broadcast %cst_11 : f32 to vector<8x128xf32>
    %138 = arith.addf %137, %136 : vector<8x128xf32>
    %139 = arith.divf %137, %138 : vector<8x128xf32>
    %c0_12 = arith.constant 0 : index
    %c0_13 = arith.constant 0 : index
    %140 = vector.load %arg5[%c0_12, %c0_13] : memref<8x128xf32, #tpu.memory_space<vmem>>, vector<8x128xf32>
    tpu.vector_store %arg5[%c0_12, %c0_13], %139 {strides = array<i32>} : memref<8x128xf32, #tpu.memory_space<vmem>>, vector<8x128xf32>,
    return
  }
  func.func @transform_0(%arg0: i32) -> i32 {
    %c0_i32 = arith.constant 0 : i32
    %c0_i32_0 = arith.constant 0 : i32
    return %c0_i32 : i32
  }
  func.func @transform_1(%arg0: i32) -> (i32, i32) {
    %c0_i32 = arith.constant 0 : i32
    %c0_i32_0 = arith.constant 0 : i32
    return %arg0, %c0_i32 : i32, i32
  }
  func.func @transform_2(%arg0: i32) -> (i32, i32) {
    %c0_i32 = arith.constant 0 : i32
    %c0_i32_0 = arith.constant 0 : i32
    return %arg0, %c0_i32 : i32, i32
  }
  func.func @transform_3(%arg0: i32) -> (i32, i32) {
    %c0_i32 = arith.constant 0 : i32
    %c0_i32_0 = arith.constant 0 : i32
    return %arg0, %c0_i32 : i32, i32
  }
  func.func @transform_4(%arg0: i32) -> (i32, i32) {
    %c0_i32 = arith.constant 0 : i32
    %c0_i32_0 = arith.constant 0 : i32
    return %arg0, %c0_i32 : i32, i32
  }
}

</mosaic_0001>

<llo_original>
// kernel: neural_regressor_forward.1
$region0: #{neural_regressor_forward.1}
  #allocation0 [shape = 'u32[]', space=smem, size = 0x4, offset = 0x4, fixed_abs, tag = 'smem constant byte address 0x4 - core index']
  #allocation1 [shape = 'u32[144,128]{1,0:T(1,128)}', space=vmem, size = 0x12000, scoped, tag = 'internal scratch']
  %s0 = inlined_call_operand.vmem [shape: f32[29], index: 0, kind: input, shape index: {}]
  %s1 = inlined_call_operand.vmem [shape: f32[8,128], index: 1, kind: input, shape index: {}]
  %s2 = inlined_call_operand.vmem [shape: f32[8,128], index: 2, kind: input, shape index: {}]
  %s3 = inlined_call_operand.vmem [shape: f32[8,128], index: 3, kind: input, shape index: {}]
  %s4 = inlined_call_operand.vmem [shape: f32[8,128], index: 4, kind: output, shape index: {}]
  %s5 = sld [smem:[#allocation0]]
  $region30: #{neural_regressor_forward.1} parent=0
    _
  %s7 = ssub.s32 1, %s5
  %s8 = scalar_select 0, %s7, %s5
  $region1: #{neural_regressor_forward.1} parent=0
    #allocation2 [shape = 'u8[512]{0}', space=smem, size = 0x200, scoped, tag = 'input window, operand 0, single buffered']
    #allocation3 [shape = 's32[1]{0}', space=sflag, size = 0x4, scoped, tag = 'scoped memory for neural_regressor_forward.1']
    %9 = vsyncpa [#allocation3], 0
    // Predicated region
    $region2: #{neural_regressor_forward.1} parent=1 // pred_check
      _
    $region3: #{neural_regressor_forward.1} parent=1 // pred_check_branch
      %11 = sbr.rel (0) target = $region5
    $region4: #{neural_regressor_forward.1} parent=1 // pred_region
      %s13 = ssub.s32 16, 16
      %14 = vsyncadd [#allocation3], %s13
      %s16 = sshll.u32 %s0, 4
      %s17 = int_to_ptr.vmem [resolvable:$true] %s16
      %19 = dma.vmem_to_smem %s17, 16, [#allocation2], [#allocation3]
    $region5: #{neural_regressor_forward.1} parent=1 // pred_fallthru
      _
    // Predicated region
    $region6: #{neural_regressor_forward.1} parent=1 // pred_check
      _
    $region7: #{neural_regressor_forward.1} parent=1 // pred_check_branch
      %21 = sbr.rel (0) target = $region9
    $region8: #{neural_regressor_forward.1} parent=1 // pred_region
      _
    $region9: #{neural_regressor_forward.1} parent=1 // pred_fallthru
      _
    // Predicated region
    $region10: #{neural_regressor_forward.1} parent=1 // pred_check
      _
    $region11: #{neural_regressor_forward.1} parent=1 // pred_check_branch
      %23 = sbr.rel (0) target = $region13
    $region12: #{neural_regressor_forward.1} parent=1 // pred_region
      _
    $region13: #{neural_regressor_forward.1} parent=1 // pred_fallthru
      _
    // Predicated region
    $region14: #{neural_regressor_forward.1} parent=1 // pred_check
      _
    $region15: #{neural_regressor_forward.1} parent=1 // pred_check_branch
      %25 = sbr.rel (0) target = $region17
    $region16: #{neural_regressor_forward.1} parent=1 // pred_region
      _
    $region17: #{neural_regressor_forward.1} parent=1 // pred_fallthru
      _
    // Predicated region
    $region18: #{neural_regressor_forward.1} parent=1 // pred_check
      _
    $region19: #{neural_regressor_forward.1} parent=1 // pred_check_branch
      %27 = sbr.rel (0) target = $region21
    $region20: #{neural_regressor_forward.1} parent=1 // pred_region
      %28 = dma.done [#allocation3], 16
    $region21: #{neural_regressor_forward.1} parent=1 // pred_fallthru
      _
    %29 = sfence
    %v30 = vld [vmem:[%s1] sm:$0xff]
    %v31 = vld [vmem:[%s2] sm:$0xff]
    %v32 = vld [vmem:[%s3] sm:$0xff]
    %s33 = sld [smem:[#allocation2]]
    %v34 = vstv %s33
    %v35 = vmul.f32 %v30, %v34
    %s36 = sld [smem:[#allocation2 + $0x4]]
    %v37 = vstv %s36
    %v38 = vmul.f32 %v31, %v37
    %v39 = vadd.f32 %v35, %v38
    %s40 = sld [smem:[#allocation2 + $0x8]]
    %v41 = vstv %s40
    %v42 = vmul.f32 %v32, %v41
    %v43 = vadd.f32 %v39, %v42
    %s44 = sld [smem:[#allocation2 + $0xc]]
    %v45 = vstv %s44
    %v46 = vadd.f32 %v43, %v45
    %v47 = vxor.u32 %v46, 2147483648
    %v48 = vmul.f32 %v47, 1.442695
    %v49 = vpow.pop %v48
    %v50 = vadd.f32 %v49, 1.0
    %v51 = vrcp.pop %v50
    %v52 = vmul.f32 1.0, %v51
    %s53 = sld [smem:[#allocation2 + $0x1]]
    %v54 = vstv %s53
    %v55 = vmul.f32 %v30, %v54
    %s56 = sld [smem:[#allocation2 + $0x5]]
    %v57 = vstv %s56
    %v58 = vmul.f32 %v31, %v57
    %v59 = vadd.f32 %v55, %v58
    %s60 = sld [smem:[#allocation2 + $0x9]]
    %v61 = vstv %s60
    %v62 = vmul.f32 %v32, %v61
    %v63 = vadd.f32 %v59, %v62
    %s64 = sld [smem:[#allocation2 + $0xd]]
    %v65 = vstv %s64
    %v66 = vadd.f32 %v63, %v65
    %v67 = vxor.u32 %v66, 2147483648
    %v68 = vmul.f32 %v67, 1.442695
    %v69 = vpow.pop %v68
    %v70 = vadd.f32 %v69, 1.0
    %v71 = vrcp.pop %v70
    %v72 = vmul.f32 1.0, %v71
    %s73 = sld [smem:[#allocation2 + $0x2]]
    %v74 = vstv %s73
    %v75 = vmul.f32 %v30, %v74
    %s76 = sld [smem:[#allocation2 + $0x6]]
    %v77 = vstv %s76
    %v78 = vmul.f32 %v31, %v77
    %v79 = vadd.f32 %v75, %v78
    %s80 = sld [smem:[#allocation2 + $0xa]]
    %v81 = vstv %s80
    %v82 = vmul.f32 %v32, %v81
    %v83 = vadd.f32 %v79, %v82
    %s84 = sld [smem:[#allocation2 + $0xe]]
    %v85 = vstv %s84
    %v86 = vadd.f32 %v83, %v85
    %v87 = vxor.u32 %v86, 2147483648
    %v88 = vmul.f32 %v87, 1.442695
    %v89 = vpow.pop %v88
    %v90 = vadd.f32 %v89, 1.0
    %v91 = vrcp.pop %v90
    %v92 = vmul.f32 1.0, %v91
    %s93 = sld [smem:[#allocation2 + $0x3]]
    %v94 = vstv %s93
    %v95 = vmul.f32 %v30, %v94
    %s96 = sld [smem:[#allocation2 + $0x7]]
    %v97 = vstv %s96
    %v98 = vmul.f32 %v31, %v97
    %v99 = vadd.f32 %v95, %v98
    %s100 = sld [smem:[#allocation2 + $0xb]]
    %v101 = vstv %s100
    %v102 = vmul.f32 %v32, %v101
    %v103 = vadd.f32 %v99, %v102
    %s104 = sld [smem:[#allocation2 + $0xf]]
    %v105 = vstv %s104
    %v106 = vadd.f32 %v103, %v105
    %v107 = vxor.u32 %v106, 2147483648
    %v108 = vmul.f32 %v107, 1.442695
    %v109 = vpow.pop %v108
    %v110 = vadd.f32 %v109, 1.0
    %v111 = vrcp.pop %v110
    %v112 = vmul.f32 1.0, %v111
    %s113 = sld [smem:[#allocation2 + $0x10]]
    %v114 = vstv %s113
    %v115 = vmul.f32 %v52, %v114
    %s116 = sld [smem:[#allocation2 + $0x12]]
    %v117 = vstv %s116
    %v118 = vmul.f32 %v72, %v117
    %v119 = vadd.f32 %v115, %v118
    %s120 = sld [smem:[#allocation2 + $0x14]]
    %v121 = vstv %s120
    %v122 = vmul.f32 %v92, %v121
    %v123 = vadd.f32 %v119, %v122
    %s124 = sld [smem:[#allocation2 + $0x16]]
    %v125 = vstv %s124
    %v126 = vmul.f32 %v112, %v125
    %v127 = vadd.f32 %v123, %v126
    %s128 = sld [smem:[#allocation2 + $0x18]]
    %v129 = vstv %s128
    %v130 = vadd.f32 %v127, %v129
    %v131 = vxor.u32 %v130, 2147483648
    %v132 = vmul.f32 %v131, 1.442695
    %v133 = vpow.pop %v132
    %v134 = vadd.f32 %v133, 1.0
    %v135 = vrcp.pop %v134
    %v136 = vmul.f32 1.0, %v135
    %s137 = sld [smem:[#allocation2 + $0x11]]
    %v138 = vstv %s137
    %v139 = vmul.f32 %v52, %v138
    %s140 = sld [smem:[#allocation2 + $0x13]]
    %v141 = vstv %s140
    %v142 = vmul.f32 %v72, %v141
    %v143 = vadd.f32 %v139, %v142
    %s144 = sld [smem:[#allocation2 + $0x15]]
    %v145 = vstv %s144
    %v146 = vmul.f32 %v92, %v145
    %v147 = vadd.f32 %v143, %v146
    %s148 = sld [smem:[#allocation2 + $0x17]]
    %v149 = vstv %s148
    %v150 = vmul.f32 %v112, %v149
    %v151 = vadd.f32 %v147, %v150
    %s152 = sld [smem:[#allocation2 + $0x19]]
    %v153 = vstv %s152
    %v154 = vadd.f32 %v151, %v153
    %v155 = vxor.u32 %v154, 2147483648
    %v156 = vmul.f32 %v155, 1.442695
    %v157 = vpow.pop %v156
    %v158 = vadd.f32 %v157, 1.0
    %v159 = vrcp.pop %v158
    %v160 = vmul.f32 1.0, %v159
    %s161 = sld [smem:[#allocation2 + $0x1a]]
    %v162 = vstv %s161
    %v163 = vmul.f32 %v136, %v162
    %s164 = sld [smem:[#allocation2 + $0x1b]]
    %v165 = vstv %s164
    %v166 = vmul.f32 %v160, %v165
    %v167 = vadd.f32 %v163, %v166
    %s168 = sld [smem:[#allocation2 + $0x1c]]
    %v169 = vstv %s168
    %v170 = vadd.f32 %v167, %v169
    %v171 = vxor.u32 %v170, 2147483648
    %v172 = vmul.f32 %v171, 1.442695
    %v173 = vpow.pop %v172
    %v174 = vadd.f32 %v173, 1.0
    %v175 = vrcp.pop %v174
    %v176 = vmul.f32 1.0, %v175
    %177 = vst [vmem:[%s4] sm:$0xff] %v176
    // Predicated region
    $region22: #{neural_regressor_forward.1} parent=1 // pred_check
      _
    $region23: #{neural_regressor_forward.1} parent=1 // pred_check_branch
      %179 = sbr.rel (0) target = $region25
    $region24: #{neural_regressor_forward.1} parent=1 // pred_region
      _
    $region25: #{neural_regressor_forward.1} parent=1 // pred_fallthru
      _
    // Predicated region
    $region26: #{neural_regressor_forward.1} parent=1 // pred_check
      _
    $region27: #{neural_regressor_forward.1} parent=1 // pred_check_branch
      %181 = sbr.rel (0) target = $region29
    $region28: #{neural_regressor_forward.1} parent=1 // pred_region
      _
    $region29: #{neural_regressor_forward.1} parent=1 // pred_fallthru
      _
    %182 = vsyncpa [#allocation3], 1

</llo_original>
